<compile_context>
chip_gen: v5e
topology: v5e:2x2
jax: 0.10.0
libtpu: 0.0.40
codegen_flags: <defaults>
</compile_context>

<pallas_src>
import jax
import jax.numpy as jnp
from jax.experimental import pallas as pl
from jax.experimental.pallas import tpu as pltpu


def _round_up(n, m):
    return ((n + m - 1) // m) * m


def _default_block_b(B):
    if B < 256:
        return B                       # single full-extent tile
    # Big tiles amortize the ~0.35us per-grid-step overhead; keeping >=2 grid
    # steps lets dimension_semantics=("parallel",) shard batch tiles across
    # v7x's two TensorCores. VMEM cost at 4096 lanes is ~1-3 MB (trivial).
    return min(4096, _round_up(pl.cdiv(B, 2), 128))


def mlp_kernel(xT_ref, w1_ref, b1_ref, w2_ref, b2_ref,
               w3_ref, b3_ref, w4_ref, b4_ref, o_ref):
    cdt = w1_ref.dtype                  # MXU operand dtype (bf16 by default)

    # x tile arrives feature-major [in_dim, block_b] in f32; cast to the MXU
    # operand dtype here (VPU op, hidden under the matmul cadence) rather than
    # in the wrapper.
    xT = xT_ref[...].astype(cdt)

    # Weights/biases are VMEM-resident across the whole batch grid (constant
    # index_map): load once per grid step straight from VMEM.
    w1 = w1_ref[...]
    b1 = b1_ref[...]                    # [h1, 1] f32
    w2 = w2_ref[...]
    b2 = b2_ref[...]
    w3 = w3_ref[...]
    b3 = b3_ref[...]
    w4 = w4_ref[...]                    # [h3, 1] f32 column (VPU/XLU path)
    b4 = b4_ref[...]                    # [1, 1]  f32

    # Layers 1-3: lane-dense MXU matmuls, f32 accumulation; bias add + sigmoid
    # in f32 (keeps the EUP path valid on v5e which has no bf16 VPU/EUP).
    a1 = jax.nn.sigmoid(
        jnp.dot(w1, xT, preferred_element_type=jnp.float32) + b1)            # [h1, tb]
    a2 = jax.nn.sigmoid(
        jnp.dot(w2, a1.astype(cdt), preferred_element_type=jnp.float32) + b2)  # [h2, tb]
    a3 = jax.nn.sigmoid(
        jnp.dot(w3, a2.astype(cdt), preferred_element_type=jnp.float32) + b3)  # [h3, tb]

    # Layer 4 has a single output feature: a VPU broadcast-multiply plus an
    # XLU sublane reduction beats a degenerate M=1 MXU matmul, and the result
    # [1, tb] is already lane-dense for the output store.
    h4 = jnp.sum(a3 * w4, axis=0, keepdims=True) + b4
    o_ref[...] = jax.nn.sigmoid(h4)


def mlp_forward(x, params, *, compute_dtype=jnp.bfloat16, block_b=None):
    """4-layer MLP (Linear+Sigmoid x4) forward pass in one Pallas kernel.

    x:      [B, input_dim] float32
    params: (w1, b1, w2, b2, w3, b3, w4, b4) in native nn.Linear layout:
            wi: [out_i, in_i], bi: [out_i]
    compute_dtype: MXU operand dtype (bfloat16 default on all generations;
                   accumulation, bias add and sigmoid are always float32).
    block_b: batch tile size (lane axis). Defaults to <=4096 with >=2 grid
             steps for v7x megacore sharding.
    returns [B, 1] float32
    """
    w1, b1, w2, b2, w3, b3, w4, b4 = params
    B, in_dim = x.shape
    h1, h2, h3 = w1.shape[0], w2.shape[0], w3.shape[0]

    if block_b is None:
        block_b = _default_block_b(B)
    else:
        block_b = _round_up(block_b, 128)
    if block_b >= B:
        block_b = B                      # single full-extent tile (any B)
    grid = (pl.cdiv(B, block_b),)        # trailing partial block handled by Pallas

    # Batch-in-lanes layout: present x as [in_dim, B]. This transpose is pure
    # layout plumbing (one tiny XLA pass over x); it makes every activation and
    # the output lane-dense inside the kernel.
    xT = jnp.transpose(x)                # stays f32; bf16 cast happens in-kernel

    # Weights in nn.Linear [out, in] order, cast to MXU operand dtype (tiny).
    w1c = w1.astype(compute_dtype)
    w2c = w2.astype(compute_dtype)
    w3c = w3.astype(compute_dtype)
    # Layer-4 weight as an f32 column for the VPU/XLU path; biases as f32
    # columns added after f32 accumulation.
    w4c = w4.reshape(h3, 1).astype(jnp.float32)
    b1c = b1.reshape(h1, 1).astype(jnp.float32)
    b2c = b2.reshape(h2, 1).astype(jnp.float32)
    b3c = b3.reshape(h3, 1).astype(jnp.float32)
    b4c = b4.reshape(1, 1).astype(jnp.float32)

    def resident(arr):
        # Same block index every grid step -> stays in VMEM, no re-DMA.
        return pl.BlockSpec(arr.shape, lambda i: (0, 0))

    out = pl.pallas_call(
        mlp_kernel,
        out_shape=jax.ShapeDtypeStruct((1, B), jnp.float32),
        grid=grid,
        in_specs=[
            pl.BlockSpec((in_dim, block_b), lambda i: (0, i)),   # x^T: batch-tiled on lanes
            resident(w1c), resident(b1c),
            resident(w2c), resident(b2c),
            resident(w3c), resident(b3c),
            resident(w4c), resident(b4c),
        ],
        out_specs=pl.BlockSpec((1, block_b), lambda i: (0, i)),  # lane-dense output slab
        compiler_params=pltpu.CompilerParams(
            dimension_semantics=("parallel",)),  # shards batch tiles across v7x's 2 TCs
    )(xT, w1c, b1c, w2c, b2c, w3c, b3c, w4c, b4c)

    # [1, B] slab -> [B, 1] to match the PyTorch module's output shape.
    return out.reshape(B, 1)


def init_params(key, input_dim, h1, h2, h3):
    """Deterministic init mimicking nn.Linear: uniform(-1/sqrt(fan_in), +1/sqrt(fan_in)),
    weights stored in native nn.Linear [out, in] order, biases [out]."""
    dims = [(input_dim, h1), (h1, h2), (h2, h3), (h3, 1)]
    params = []
    keys = jax.random.split(key, 2 * len(dims))
    for i, (fan_in, fan_out) in enumerate(dims):
        bound = 1.0 / jnp.sqrt(float(fan_in))
        w = jax.random.uniform(keys[2 * i], (fan_out, fan_in),
                               minval=-bound, maxval=bound, dtype=jnp.float32)
        b = jax.random.uniform(keys[2 * i + 1], (fan_out,),
                               minval=-bound, maxval=bound, dtype=jnp.float32)
        params += [w, b]
    return tuple(params)


def reference_forward(x, params):
    w1, b1, w2, b2, w3, b3, w4, b4 = params
    a1 = jax.nn.sigmoid(x @ w1.T + b1)
    a2 = jax.nn.sigmoid(a1 @ w2.T + b2)
    a3 = jax.nn.sigmoid(a2 @ w3.T + b3)
    return jax.nn.sigmoid(a3 @ w4.T + b4)


if __name__ == "__main__":
    key = jax.random.PRNGKey(0)
    k_x, k_p, k_x2 = jax.random.split(key, 3)

    batch, input_dim, h1, h2, h3 = 8, 16, 32, 32, 32
    params = init_params(k_p, input_dim, h1, h2, h3)

    # Small batch: single full-extent tile. Default bf16 MXU operands, then the
    # f32-operand path at tight tolerance.
    x = jax.random.normal(k_x, (batch, input_dim), dtype=jnp.float32)
    ref = reference_forward(x, params)

    out = jax.block_until_ready(mlp_forward(x, params))
    assert out.shape == (batch, 1)
    assert jnp.allclose(out, ref, atol=3e-2, rtol=3e-2)

    out_f32 = jax.block_until_ready(mlp_forward(x, params, compute_dtype=jnp.float32))
    assert jnp.allclose(out_f32, ref, atol=1e-4, rtol=1e-4)

    # Multi-tile pipelined grid with a partial trailing block (300 = 2*128 + 44),
    # no padding pass: OOB lanes are discarded on writeback.
    B2 = 300
    x2 = jax.random.normal(k_x2, (B2, input_dim), dtype=jnp.float32)
    ref2 = reference_forward(x2, params)

    out2 = jax.block_until_ready(mlp_forward(x2, params, block_b=128))
    assert out2.shape == (B2, 1)
    assert jnp.allclose(out2, ref2, atol=3e-2, rtol=3e-2)

    out2_f32 = jax.block_until_ready(
        mlp_forward(x2, params, compute_dtype=jnp.float32, block_b=128))
    assert jnp.allclose(out2_f32, ref2, atol=1e-4, rtol=1e-4)

    print("KERNEL_OK")
</pallas_src>

<mosaic_0001>
module attributes {stable_mosaic.version = 11 : i64} {
  func.func @mlp_kernel(%arg0: i32, %arg1: memref<16x8xf32, #tpu.memory_space<vmem>>, %arg2: memref<32x16xbf16, #tpu.memory_space<vmem>>, %arg3: memref<32x1xf32, #tpu.memory_space<vmem>>, %arg4: memref<32x32xbf16, #tpu.memory_space<vmem>>, %arg5: memref<32x1xf32, #tpu.memory_space<vmem>>, %arg6: memref<32x32xbf16, #tpu.memory_space<vmem>>, %arg7: memref<32x1xf32, #tpu.memory_space<vmem>>, %arg8: memref<32x1xf32, #tpu.memory_space<vmem>>, %arg9: memref<1x1xf32, #tpu.memory_space<vmem>>, %arg10: memref<1x8xf32, #tpu.memory_space<vmem>>) attributes {dimension_semantics = [#tpu.dimension_semantics<parallel>], iteration_bounds = array<i64: 1>, scalar_prefetch = 0 : i64, scratch_operands = 0 : i64, tpu.core_type = #tpu.core_type<tc>, window_params = [{transform_indices = @transform_0, window_bounds = array<i64: 16, 8>}, {pipeline_mode = #tpu.pipeline_mode<synchronous>, transform_indices = @transform_1, window_bounds = array<i64: 32, 16>}, {pipeline_mode = #tpu.pipeline_mode<synchronous>, transform_indices = @transform_2, window_bounds = array<i64: 32, 1>}, {pipeline_mode = #tpu.pipeline_mode<synchronous>, transform_indices = @transform_3, window_bounds = array<i64: 32, 32>}, {pipeline_mode = #tpu.pipeline_mode<synchronous>, transform_indices = @transform_4, window_bounds = array<i64: 32, 1>}, {pipeline_mode = #tpu.pipeline_mode<synchronous>, transform_indices = @transform_5, window_bounds = array<i64: 32, 32>}, {pipeline_mode = #tpu.pipeline_mode<synchronous>, transform_indices = @transform_6, window_bounds = array<i64: 32, 1>}, {pipeline_mode = #tpu.pipeline_mode<synchronous>, transform_indices = @transform_7, window_bounds = array<i64: 32, 1>}, {pipeline_mode = #tpu.pipeline_mode<synchronous>, transform_indices = @transform_8, window_bounds = array<i64: 1, 1>}, {transform_indices = @transform_9, window_bounds = array<i64: 1, 8>}]} {
    %c0 = arith.constant 0 : index
    %c0_0 = arith.constant 0 : index
    %0 = vector.load %arg1[%c0, %c0_0] : memref<16x8xf32, #tpu.memory_space<vmem>>, vector<16x8xf32>
    %1 = arith.truncf %0 : vector<16x8xf32> to vector<16x8xbf16>
    %c0_1 = arith.constant 0 : index
    %c0_2 = arith.constant 0 : index
    %2 = vector.load %arg2[%c0_1, %c0_2] : memref<32x16xbf16, #tpu.memory_space<vmem>>, vector<32x16xbf16>
    %c0_3 = arith.constant 0 : index
    %c0_4 = arith.constant 0 : index
    %3 = vector.load %arg3[%c0_3, %c0_4] : memref<32x1xf32, #tpu.memory_space<vmem>>, vector<32x1xf32>
    %c0_5 = arith.constant 0 : index
    %c0_6 = arith.constant 0 : index
    %4 = vector.load %arg4[%c0_5, %c0_6] : memref<32x32xbf16, #tpu.memory_space<vmem>>, vector<32x32xbf16>
    %c0_7 = arith.constant 0 : index
    %c0_8 = arith.constant 0 : index
    %5 = vector.load %arg5[%c0_7, %c0_8] : memref<32x1xf32, #tpu.memory_space<vmem>>, vector<32x1xf32>
    %c0_9 = arith.constant 0 : index
    %c0_10 = arith.constant 0 : index
    %6 = vector.load %arg6[%c0_9, %c0_10] : memref<32x32xbf16, #tpu.memory_space<vmem>>, vector<32x32xbf16>
    %c0_11 = arith.constant 0 : index
    %c0_12 = arith.constant 0 : index
    %7 = vector.load %arg7[%c0_11, %c0_12] : memref<32x1xf32, #tpu.memory_space<vmem>>, vector<32x1xf32>
    %c0_13 = arith.constant 0 : index
    %c0_14 = arith.constant 0 : index
    %8 = vector.load %arg8[%c0_13, %c0_14] : memref<32x1xf32, #tpu.memory_space<vmem>>, vector<32x1xf32>
    %c0_15 = arith.constant 0 : index
    %c0_16 = arith.constant 0 : index
    %9 = vector.load %arg9[%c0_15, %c0_16] : memref<1x1xf32, #tpu.memory_space<vmem>>, vector<1x1xf32>
    %cst = arith.constant dense<0.000000e+00> : vector<32x8xf32>
    %10 = tpu.matmul %2, %1, %cst {dimension_numbers = #tpu.dot_dimension_numbers<[1], [0], [0], [1], [0, 0, 1, 1], [], []>} : vector<32x16xbf16>, vector<16x8xbf16>, vector<32x8xf32> -> vector<32x8xf32>
    %11 = vector.broadcast %3 : vector<32x1xf32> to vector<32x8xf32>
    %12 = arith.addf %10, %11 : vector<32x8xf32>
    %13 = arith.negf %12 : vector<32x8xf32>
    %14 = math.exp %13 : vector<32x8xf32>
    %cst_17 = arith.constant 1.000000e+00 : f32
    %15 = vector.broadcast %cst_17 : f32 to vector<32x8xf32>
    %16 = arith.addf %15, %14 : vector<32x8xf32>
    %17 = arith.divf %15, %16 : vector<32x8xf32>
    %18 = arith.truncf %17 : vector<32x8xf32> to vector<32x8xbf16>
    %cst_18 = arith.constant dense<0.000000e+00> : vector<32x8xf32>
    %19 = tpu.matmul %4, %18, %cst_18 {dimension_numbers = #tpu.dot_dimension_numbers<[1], [0], [0], [1], [0, 0, 1, 1], [], []>} : vector<32x32xbf16>, vector<32x8xbf16>, vector<32x8xf32> -> vector<32x8xf32>
    %20 = vector.broadcast %5 : vector<32x1xf32> to vector<32x8xf32>
    %21 = arith.addf %19, %20 : vector<32x8xf32>
    %22 = arith.negf %21 : vector<32x8xf32>
    %23 = math.exp %22 : vector<32x8xf32>
    %cst_19 = arith.constant 1.000000e+00 : f32
    %24 = vector.broadcast %cst_19 : f32 to vector<32x8xf32>
    %25 = arith.addf %24, %23 : vector<32x8xf32>
    %26 = arith.divf %24, %25 : vector<32x8xf32>
    %27 = arith.truncf %26 : vector<32x8xf32> to vector<32x8xbf16>
    %cst_20 = arith.constant dense<0.000000e+00> : vector<32x8xf32>
    %28 = tpu.matmul %6, %27, %cst_20 {dimension_numbers = #tpu.dot_dimension_numbers<[1], [0], [0], [1], [0, 0, 1, 1], [], []>} : vector<32x32xbf16>, vector<32x8xbf16>, vector<32x8xf32> -> vector<32x8xf32>
    %29 = vector.broadcast %7 : vector<32x1xf32> to vector<32x8xf32>
    %30 = arith.addf %28, %29 : vector<32x8xf32>
    %31 = arith.negf %30 : vector<32x8xf32>
    %32 = math.exp %31 : vector<32x8xf32>
    %cst_21 = arith.constant 1.000000e+00 : f32
    %33 = vector.broadcast %cst_21 : f32 to vector<32x8xf32>
    %34 = arith.addf %33, %32 : vector<32x8xf32>
    %35 = arith.divf %33, %34 : vector<32x8xf32>
    %36 = vector.broadcast %8 : vector<32x1xf32> to vector<32x8xf32>
    %37 = arith.mulf %35, %36 : vector<32x8xf32>
    %cst_22 = arith.constant dense<0.000000e+00> : vector<8xf32>
    %38 = vector.multi_reduction <add>, %37, %cst_22 [0] : vector<32x8xf32> to vector<8xf32>
    %39 = vector.shape_cast %38 : vector<8xf32> to vector<1x8xf32>
    %40 = vector.broadcast %9 : vector<1x1xf32> to vector<1x8xf32>
    %41 = arith.addf %39, %40 : vector<1x8xf32>
    %42 = arith.negf %41 : vector<1x8xf32>
    %43 = math.exp %42 : vector<1x8xf32>
    %cst_23 = arith.constant 1.000000e+00 : f32
    %44 = vector.broadcast %cst_23 : f32 to vector<1x8xf32>
    %45 = arith.addf %44, %43 : vector<1x8xf32>
    %46 = arith.divf %44, %45 : vector<1x8xf32>
    %c0_24 = arith.constant 0 : index
    %c0_25 = arith.constant 0 : index
    %47 = vector.load %arg10[%c0_24, %c0_25] : memref<1x8xf32, #tpu.memory_space<vmem>>, vector<1x8xf32>
    tpu.vector_store %arg10[%c0_24, %c0_25], %46 {strides = array<i32>} : memref<1x8xf32, #tpu.memory_space<vmem>>, vector<1x8xf32>,
    return
  }
  func.func @transform_0(%arg0: i32) -> (i32, i32) {
    %c0_i32 = arith.constant 0 : i32
    %c0_i32_0 = arith.constant 0 : i32
    return %c0_i32, %arg0 : i32, i32
  }
  func.func @transform_1(%arg0: i32) -> (i32, i32) {
    %c0_i32 = arith.constant 0 : i32
    %c0_i32_0 = arith.constant 0 : i32
    %c0_i32_1 = arith.constant 0 : i32
    return %c0_i32, %c0_i32_0 : i32, i32
  }
  func.func @transform_2(%arg0: i32) -> (i32, i32) {
    %c0_i32 = arith.constant 0 : i32
    %c0_i32_0 = arith.constant 0 : i32
    %c0_i32_1 = arith.constant 0 : i32
    return %c0_i32, %c0_i32_0 : i32, i32
  }
  func.func @transform_3(%arg0: i32) -> (i32, i32) {
    %c0_i32 = arith.constant 0 : i32
    %c0_i32_0 = arith.constant 0 : i32
    %c0_i32_1 = arith.constant 0 : i32
    return %c0_i32, %c0_i32_0 : i32, i32
  }
  func.func @transform_4(%arg0: i32) -> (i32, i32) {
    %c0_i32 = arith.constant 0 : i32
    %c0_i32_0 = arith.constant 0 : i32
    %c0_i32_1 = arith.constant 0 : i32
    return %c0_i32, %c0_i32_0 : i32, i32
  }
  func.func @transform_5(%arg0: i32) -> (i32, i32) {
    %c0_i32 = arith.constant 0 : i32
    %c0_i32_0 = arith.constant 0 : i32
    %c0_i32_1 = arith.constant 0 : i32
    return %c0_i32, %c0_i32_0 : i32, i32
  }
  func.func @transform_6(%arg0: i32) -> (i32, i32) {
    %c0_i32 = arith.constant 0 : i32
    %c0_i32_0 = arith.constant 0 : i32
    %c0_i32_1 = arith.constant 0 : i32
    return %c0_i32, %c0_i32_0 : i32, i32
  }
  func.func @transform_7(%arg0: i32) -> (i32, i32) {
    %c0_i32 = arith.constant 0 : i32
    %c0_i32_0 = arith.constant 0 : i32
    %c0_i32_1 = arith.constant 0 : i32
    return %c0_i32, %c0_i32_0 : i32, i32
  }
  func.func @transform_8(%arg0: i32) -> (i32, i32) {
    %c0_i32 = arith.constant 0 : i32
    %c0_i32_0 = arith.constant 0 : i32
    %c0_i32_1 = arith.constant 0 : i32
    return %c0_i32, %c0_i32_0 : i32, i32
  }
  func.func @transform_9(%arg0: i32) -> (i32, i32) {
    %c0_i32 = arith.constant 0 : i32
    %c0_i32_0 = arith.constant 0 : i32
    return %c0_i32, %arg0 : i32, i32
  }
}

</mosaic_0001>

<llo_original>
// kernel: tpu_custom_call.1
$region0: #{tpu_custom_call.1}
  #allocation0 [shape = 'u32[]', space=smem, size = 0x4, offset = 0x4, fixed_abs, tag = 'smem constant byte address 0x4 - core index']
  #allocation1 [shape = 'u32[72,128]{1,0:T(1,128)}', space=vmem, size = 0x9000, scoped, tag = 'internal scratch']
  #allocation2 [shape = 'f32[1,1]{1,0:T(1,128)S(1)}', space=vmem, size = 0x200, scoped, tag = 'scoped memory for tpu_custom_call.1']
  %s0 = inlined_call_operand.vmem [shape: f32[16,8], index: 0, kind: input, shape index: {}]
  %s1 = inlined_call_operand.vmem [shape: bf16[32,16], index: 1, kind: input, shape index: {}]
  %s2 = inlined_call_operand.vmem [shape: f32[32,1], index: 2, kind: input, shape index: {}]
  %s3 = inlined_call_operand.vmem [shape: bf16[32,32], index: 3, kind: input, shape index: {}]
  %s4 = inlined_call_operand.vmem [shape: f32[32,1], index: 4, kind: input, shape index: {}]
  %s5 = inlined_call_operand.vmem [shape: bf16[32,32], index: 5, kind: input, shape index: {}]
  %s6 = inlined_call_operand.vmem [shape: f32[32,1], index: 6, kind: input, shape index: {}]
  %s7 = inlined_call_operand.vmem [shape: f32[32,1], index: 7, kind: input, shape index: {}]
  %s8 = inlined_call_operand.<no memory space> [shape: f32[1,1], index: 8, kind: input, shape index: {}]
  %s9 = inlined_call_operand.hbm [shape: f32[1,8], index: 9, kind: output, shape index: {}]
  %s10 = sld [smem:[#allocation0]]
  $region46: #{tpu_custom_call.1} parent=0
    _
  %s12 = ssub.s32 1, %s10
  %s13 = scalar_select 0, %s12, %s10
  %v14 = vstv %s8
  %15 = vst [vmem:[#allocation2] sm:$0x1] %v14
  $region1: #{tpu_custom_call.1} parent=0
    #allocation3 [shape = 'u8[512]{0}', space=vmem, size = 0x400, scoped, tag = 'output window, operand 0, single buffered']
    #allocation4 [shape = 's32[1]{0}', space=sflag, size = 0x4, scoped, tag = 'scoped memory for tpu_custom_call.1']
    %16 = vsyncpa [#allocation4], 0
    // Predicated region
    $region2: #{tpu_custom_call.1} parent=1 // pred_check
      _
    $region3: #{tpu_custom_call.1} parent=1 // pred_check_branch
      %18 = sbr.rel (0) target = $region5
    $region4: #{tpu_custom_call.1} parent=1 // pred_region
      _
    $region5: #{tpu_custom_call.1} parent=1 // pred_fallthru
      _
    // Predicated region
    $region6: #{tpu_custom_call.1} parent=1 // pred_check
      _
    $region7: #{tpu_custom_call.1} parent=1 // pred_check_branch
      %20 = sbr.rel (0) target = $region9
    $region8: #{tpu_custom_call.1} parent=1 // pred_region
      _
    $region9: #{tpu_custom_call.1} parent=1 // pred_fallthru
      _
    // Predicated region
    $region10: #{tpu_custom_call.1} parent=1 // pred_check
      _
    $region11: #{tpu_custom_call.1} parent=1 // pred_check_branch
      %22 = sbr.rel (0) target = $region13
    $region12: #{tpu_custom_call.1} parent=1 // pred_region
      _
    $region13: #{tpu_custom_call.1} parent=1 // pred_fallthru
      _
    // Predicated region
    $region14: #{tpu_custom_call.1} parent=1 // pred_check
      _
    $region15: #{tpu_custom_call.1} parent=1 // pred_check_branch
      %24 = sbr.rel (0) target = $region17
    $region16: #{tpu_custom_call.1} parent=1 // pred_region
      _
    $region17: #{tpu_custom_call.1} parent=1 // pred_fallthru
      _
    // Predicated region
    $region18: #{tpu_custom_call.1} parent=1 // pred_check
      _
    $region19: #{tpu_custom_call.1} parent=1 // pred_check_branch
      %26 = sbr.rel (0) target = $region21
    $region20: #{tpu_custom_call.1} parent=1 // pred_region
      _
    $region21: #{tpu_custom_call.1} parent=1 // pred_fallthru
      _
    // Predicated region
    $region22: #{tpu_custom_call.1} parent=1 // pred_check
      _
    $region23: #{tpu_custom_call.1} parent=1 // pred_check_branch
      %28 = sbr.rel (0) target = $region25
    $region24: #{tpu_custom_call.1} parent=1 // pred_region
      _
    $region25: #{tpu_custom_call.1} parent=1 // pred_fallthru
      _
    // Predicated region
    $region26: #{tpu_custom_call.1} parent=1 // pred_check
      _
    $region27: #{tpu_custom_call.1} parent=1 // pred_check_branch
      %30 = sbr.rel (0) target = $region29
    $region28: #{tpu_custom_call.1} parent=1 // pred_region
      _
    $region29: #{tpu_custom_call.1} parent=1 // pred_fallthru
      _
    // Predicated region
    $region30: #{tpu_custom_call.1} parent=1 // pred_check
      _
    $region31: #{tpu_custom_call.1} parent=1 // pred_check_branch
      %32 = sbr.rel (0) target = $region33
    $region32: #{tpu_custom_call.1} parent=1 // pred_region
      _
    $region33: #{tpu_custom_call.1} parent=1 // pred_fallthru
      _
    // Predicated region
    $region34: #{tpu_custom_call.1} parent=1 // pred_check
      _
    $region35: #{tpu_custom_call.1} parent=1 // pred_check_branch
      %34 = sbr.rel (0) target = $region37
    $region36: #{tpu_custom_call.1} parent=1 // pred_region
      _
    $region37: #{tpu_custom_call.1} parent=1 // pred_fallthru
      _
    %v36 = vld [vmem:[%s0] sm:$0xff]
    %v37 = vld [vmem:[%s0 + $0x8] sm:$0xff]
    %v38 = vpack.c.bf16 %v37, %v36
    %v39 = vld [vmem:[%s1] sm:$0xf]
    %v40 = vld [vmem:[%s1 + $0x4] sm:$0xf]
    %v41 = vld [vmem:[%s1 + $0x8] sm:$0xf]
    %v42 = vld [vmem:[%s1 + $0xc] sm:$0xf]
    %v43 = vld [vmem:[%s2] sm:$0xff]
    %v44 = vld [vmem:[%s2 + $0x8] sm:$0xff]
    %v45 = vld [vmem:[%s2 + $0x10] sm:$0xff]
    %v46 = vld [vmem:[%s2 + $0x18] sm:$0xff]
    %v47 = vld [vmem:[%s3] sm:$0xf]
    %v48 = vld [vmem:[%s3 + $0x4] sm:$0xf]
    %v49 = vld [vmem:[%s3 + $0x8] sm:$0xf]
    %v50 = vld [vmem:[%s3 + $0xc] sm:$0xf]
    %v51 = vld [vmem:[%s4] sm:$0xff]
    %v52 = vld [vmem:[%s4 + $0x8] sm:$0xff]
    %v53 = vld [vmem:[%s4 + $0x10] sm:$0xff]
    %v54 = vld [vmem:[%s4 + $0x18] sm:$0xff]
    %v55 = vld [vmem:[%s5] sm:$0xf]
    %v56 = vld [vmem:[%s5 + $0x4] sm:$0xf]
    %v57 = vld [vmem:[%s5 + $0x8] sm:$0xf]
    %v58 = vld [vmem:[%s5 + $0xc] sm:$0xf]
    %v59 = vld [vmem:[%s6] sm:$0xff]
    %v60 = vld [vmem:[%s6 + $0x8] sm:$0xff]
    %v61 = vld [vmem:[%s6 + $0x10] sm:$0xff]
    %v62 = vld [vmem:[%s6 + $0x18] sm:$0xff]
    %v63 = vld [vmem:[%s7] sm:$0xff]
    %v64 = vld [vmem:[%s7 + $0x8] sm:$0xff]
    %v65 = vld [vmem:[%s7 + $0x10] sm:$0xff]
    %v66 = vld [vmem:[%s7 + $0x18] sm:$0xff]
    %v67 = vld [vmem:[#allocation2] sm:$0x1]
    %69 = vset.pattern.permute.xlu0 0
    %70 = vperm.xlu0 %69, %v43
    %v71 = vpop.permute.xlu0 %70
    %74 = vset.pattern.permute.xlu0 0
    %75 = vperm.xlu0 %74, %v44
    %v76 = vpop.permute.xlu0 %75
    %79 = vset.pattern.permute.xlu0 0
    %80 = vperm.xlu0 %79, %v45
    %v81 = vpop.permute.xlu0 %80
    %84 = vset.pattern.permute.xlu0 0
    %85 = vperm.xlu0 %84, %v46
    %v86 = vpop.permute.xlu0 %85
    %v92 = vunpack.c.l.b16 %v39
    %v93 = vunpack.c.l.b16 %v40
    %v94 = vunpack.c.l.b16 %v41
    %v95 = vunpack.c.l.b16 %v42
    %v96 = vpack.c.b16 %v93, %v92
    %v97 = vpack.c.b16 %v95, %v94
    %vm98 = vcmask 130048
    %v100 = vsel %vm98, %v96, 0
    %v103 = vsel %vm98, %v97, 0
    %105 = vmatpush.bf16.msra.mxu0 0
    %106 = vmatpush.bf16.msra.mxu0 0
    %107 = vmatpush.bf16.msra.mxu0 0
    %108 = vmatpush.bf16.msra.mxu0 0
    %109 = vmatpush.bf16.msra.mxu0 0
    %110 = vmatpush.bf16.msra.mxu0 0
    %111 = vmatpush.bf16.msra.mxu0 0
    %112 = vmatpush.bf16.msra.mxu0 %v38
    %113 = vmatmul.bf16.gmra.mxu0 %v100
    %v114 = vpop.f32.mrf.mxu0
    %v115 = vadd.f32 %v71, %v114
    %v116 = vpop.f32.mrf.mxu0
    %v117 = vadd.f32 %v76, %v116
    %118 = vmatmul.bf16.gmra.mxu0 %v103
    %v119 = vpop.f32.mrf.mxu0
    %v120 = vadd.f32 %v81, %v119
    %v121 = vpop.f32.mrf.mxu0
    %v122 = vadd.f32 %v86, %v121
    %123 = vdwg.mxu0
    %v124 = vxor.u32 %v115, 2147483648
    %v125 = vxor.u32 %v117, 2147483648
    %v126 = vxor.u32 %v120, 2147483648
    %v127 = vxor.u32 %v122, 2147483648
    %v128 = vmul.f32 %v124, 1.442695
    %v129 = vpow.pop %v128
    %v130 = vmul.f32 %v125, 1.442695
    %v131 = vpow.pop %v130
    %v132 = vmul.f32 %v126, 1.442695
    %v133 = vpow.pop %v132
    %v134 = vmul.f32 %v127, 1.442695
    %v135 = vpow.pop %v134
    %v136 = vadd.f32 %v129, 1.0
    %v137 = vadd.f32 %v131, 1.0
    %v138 = vadd.f32 %v133, 1.0
    %v139 = vadd.f32 %v135, 1.0
    %v140 = vrcp.pop %v136
    %v141 = vmul.f32 %v136, %v140
    %v142 = vsub.f32 1.0, %v141
    %v143 = vmul.f32 %v140, %v142
    %v144 = vadd.f32 %v140, %v143
    %vm145 = vweird.f32 %v136
    %vm146 = vweird.f32 %v140
    %vm147 = vmor %vm145, %vm146
    %v148 = vsel %vm147, %v140, %v144
    %v149 = vand.u32 2147483647, %v136
    %vm150 = vcmp.eq.f32.partialorder %v149, 8.507059e+37
    %v151 = vand.u32 %v136, 2147483648
    %v152 = vor.u32 1.1754944e-38, %v151
    %v153 = vsel %vm150, %v152, %v148
    %v154 = vmul.f32 1.0, %v153
    %v155 = vrcp.pop %v137
    %v156 = vmul.f32 %v137, %v155
    %v157 = vsub.f32 1.0, %v156
    %v158 = vmul.f32 %v155, %v157
    %v159 = vadd.f32 %v155, %v158
    %vm160 = vweird.f32 %v137
    %vm161 = vweird.f32 %v155
    %vm162 = vmor %vm160, %vm161
    %v163 = vsel %vm162, %v155, %v159
    %v164 = vand.u32 2147483647, %v137
    %vm165 = vcmp.eq.f32.partialorder %v164, 8.507059e+37
    %v166 = vand.u32 %v137, 2147483648
    %v167 = vor.u32 1.1754944e-38, %v166
    %v168 = vsel %vm165, %v167, %v163
    %v169 = vmul.f32 1.0, %v168
    %v170 = vrcp.pop %v138
    %v171 = vmul.f32 %v138, %v170
    %v172 = vsub.f32 1.0, %v171
    %v173 = vmul.f32 %v170, %v172
    %v174 = vadd.f32 %v170, %v173
    %vm175 = vweird.f32 %v138
    %vm176 = vweird.f32 %v170
    %vm177 = vmor %vm175, %vm176
    %v178 = vsel %vm177, %v170, %v174
    %v179 = vand.u32 2147483647, %v138
    %vm180 = vcmp.eq.f32.partialorder %v179, 8.507059e+37
    %v181 = vand.u32 %v138, 2147483648
    %v182 = vor.u32 1.1754944e-38, %v181
    %v183 = vsel %vm180, %v182, %v178
    %v184 = vmul.f32 1.0, %v183
    %v185 = vrcp.pop %v139
    %v186 = vmul.f32 %v139, %v185
    %v187 = vsub.f32 1.0, %v186
    %v188 = vmul.f32 %v185, %v187
    %v189 = vadd.f32 %v185, %v188
    %vm190 = vweird.f32 %v139
    %vm191 = vweird.f32 %v185
    %vm192 = vmor %vm190, %vm191
    %v193 = vsel %vm192, %v185, %v189
    %v194 = vand.u32 2147483647, %v139
    %vm195 = vcmp.eq.f32.partialorder %v194, 8.507059e+37
    %v196 = vand.u32 %v139, 2147483648
    %v197 = vor.u32 1.1754944e-38, %v196
    %v198 = vsel %vm195, %v197, %v193
    %v199 = vmul.f32 1.0, %v198
    %v200 = vpack.c.bf16 %v169, %v154
    %v201 = vpack.c.bf16 %v199, %v184
    %203 = vset.pattern.permute.xlu0 0
    %204 = vperm.xlu0 %203, %v51
    %v205 = vpop.permute.xlu0 %204
    %208 = vset.pattern.permute.xlu0 0
    %209 = vperm.xlu0 %208, %v52
    %v210 = vpop.permute.xlu0 %209
    %213 = vset.pattern.permute.xlu0 0
    %214 = vperm.xlu0 %213, %v53
    %v215 = vpop.permute.xlu0 %214
    %218 = vset.pattern.permute.xlu0 0
    %219 = vperm.xlu0 %218, %v54
    %v220 = vpop.permute.xlu0 %219
    %v226 = vunpack.c.l.b16 %v47
    %v227 = vunpack.c.l.b16 %v48
    %v228 = vunpack.c.l.b16 %v49
    %v229 = vunpack.c.l.b16 %v50
    %v230 = vpack.c.b16 %v227, %v226
    %v231 = vpack.c.b16 %v229, %v228
    %vm232 = vcmask 261120
    %v234 = vsel %vm232, %v230, 0
    %v237 = vsel %vm232, %v231, 0
    %239 = vmatpush.bf16.msra.mxu0 0
    %240 = vmatpush.bf16.msra.mxu0 0
    %241 = vmatpush.bf16.msra.mxu0 0
    %242 = vmatpush.bf16.msra.mxu0 0
    %243 = vmatpush.bf16.msra.mxu0 0
    %244 = vmatpush.bf16.msra.mxu0 0
    %245 = vmatpush.bf16.msra.mxu0 %v201
    %246 = vmatpush.bf16.msra.mxu0 %v200
    %247 = vmatmul.bf16.gmra.mxu0 %v234
    %v248 = vpop.f32.mrf.mxu0
    %v249 = vadd.f32 %v205, %v248
    %v250 = vpop.f32.mrf.mxu0
    %v251 = vadd.f32 %v210, %v250
    %252 = vmatmul.bf16.gmra.mxu0 %v237
    %v253 = vpop.f32.mrf.mxu0
    %v254 = vadd.f32 %v215, %v253
    %v255 = vpop.f32.mrf.mxu0
    %v256 = vadd.f32 %v220, %v255
    %257 = vdwg.mxu0
    %v258 = vxor.u32 %v249, 2147483648
    %v259 = vxor.u32 %v251, 2147483648
    %v260 = vxor.u32 %v254, 2147483648
    %v261 = vxor.u32 %v256, 2147483648
    %v262 = vmul.f32 %v258, 1.442695
    %v263 = vpow.pop %v262
    %v264 = vmul.f32 %v259, 1.442695
    %v265 = vpow.pop %v264
    %v266 = vmul.f32 %v260, 1.442695
    %v267 = vpow.pop %v266
    %v268 = vmul.f32 %v261, 1.442695
    %v269 = vpow.pop %v268
    %v270 = vadd.f32 %v263, 1.0
    %v271 = vadd.f32 %v265, 1.0
    %v272 = vadd.f32 %v267, 1.0
    %v273 = vadd.f32 %v269, 1.0
    %v274 = vrcp.pop %v270
    %v275 = vmul.f32 %v270, %v274
    %v276 = vsub.f32 1.0, %v275
    %v277 = vmul.f32 %v274, %v276
    %v278 = vadd.f32 %v274, %v277
    %vm279 = vweird.f32 %v270
    %vm280 = vweird.f32 %v274
    %vm281 = vmor %vm279, %vm280
    %v282 = vsel %vm281, %v274, %v278
    %v283 = vand.u32 2147483647, %v270
    %vm284 = vcmp.eq.f32.partialorder %v283, 8.507059e+37
    %v285 = vand.u32 %v270, 2147483648
    %v286 = vor.u32 1.1754944e-38, %v285
    %v287 = vsel %vm284, %v286, %v282
    %v288 = vmul.f32 1.0, %v287
    %v289 = vrcp.pop %v271
    %v290 = vmul.f32 %v271, %v289
    %v291 = vsub.f32 1.0, %v290
    %v292 = vmul.f32 %v289, %v291
    %v293 = vadd.f32 %v289, %v292
    %vm294 = vweird.f32 %v271
    %vm295 = vweird.f32 %v289
    %vm296 = vmor %vm294, %vm295
    %v297 = vsel %vm296, %v289, %v293
    %v298 = vand.u32 2147483647, %v271
    %vm299 = vcmp.eq.f32.partialorder %v298, 8.507059e+37
    %v300 = vand.u32 %v271, 2147483648
    %v301 = vor.u32 1.1754944e-38, %v300
    %v302 = vsel %vm299, %v301, %v297
    %v303 = vmul.f32 1.0, %v302
    %v304 = vrcp.pop %v272
    %v305 = vmul.f32 %v272, %v304
    %v306 = vsub.f32 1.0, %v305
    %v307 = vmul.f32 %v304, %v306
    %v308 = vadd.f32 %v304, %v307
    %vm309 = vweird.f32 %v272
    %vm310 = vweird.f32 %v304
    %vm311 = vmor %vm309, %vm310
    %v312 = vsel %vm311, %v304, %v308
    %v313 = vand.u32 2147483647, %v272
    %vm314 = vcmp.eq.f32.partialorder %v313, 8.507059e+37
    %v315 = vand.u32 %v272, 2147483648
    %v316 = vor.u32 1.1754944e-38, %v315
    %v317 = vsel %vm314, %v316, %v312
    %v318 = vmul.f32 1.0, %v317
    %v319 = vrcp.pop %v273
    %v320 = vmul.f32 %v273, %v319
    %v321 = vsub.f32 1.0, %v320
    %v322 = vmul.f32 %v319, %v321
    %v323 = vadd.f32 %v319, %v322
    %vm324 = vweird.f32 %v273
    %vm325 = vweird.f32 %v319
    %vm326 = vmor %vm324, %vm325
    %v327 = vsel %vm326, %v319, %v323
    %v328 = vand.u32 2147483647, %v273
    %vm329 = vcmp.eq.f32.partialorder %v328, 8.507059e+37
    %v330 = vand.u32 %v273, 2147483648
    %v331 = vor.u32 1.1754944e-38, %v330
    %v332 = vsel %vm329, %v331, %v327
    %v333 = vmul.f32 1.0, %v332
    %v334 = vpack.c.bf16 %v303, %v288
    %v335 = vpack.c.bf16 %v333, %v318
    %337 = vset.pattern.permute.xlu0 0
    %338 = vperm.xlu0 %337, %v59
    %v339 = vpop.permute.xlu0 %338
    %342 = vset.pattern.permute.xlu0 0
    %343 = vperm.xlu0 %342, %v60
    %v344 = vpop.permute.xlu0 %343
    %347 = vset.pattern.permute.xlu0 0
    %348 = vperm.xlu0 %347, %v61
    %v349 = vpop.permute.xlu0 %348
    %352 = vset.pattern.permute.xlu0 0
    %353 = vperm.xlu0 %352, %v62
    %v354 = vpop.permute.xlu0 %353
    %v360 = vunpack.c.l.b16 %v55
    %v361 = vunpack.c.l.b16 %v56
    %v362 = vunpack.c.l.b16 %v57
    %v363 = vunpack.c.l.b16 %v58
    %v364 = vpack.c.b16 %v361, %v360
    %v365 = vpack.c.b16 %v363, %v362
    %v367 = vsel %vm232, %v364, 0
    %v370 = vsel %vm232, %v365, 0
    %372 = vmatpush.bf16.msra.mxu0 0
    %373 = vmatpush.bf16.msra.mxu0 0
    %374 = vmatpush.bf16.msra.mxu0 0
    %375 = vmatpush.bf16.msra.mxu0 0
    %376 = vmatpush.bf16.msra.mxu0 0
    %377 = vmatpush.bf16.msra.mxu0 0
    %378 = vmatpush.bf16.msra.mxu0 %v335
    %379 = vmatpush.bf16.msra.mxu0 %v334
    %380 = vmatmul.bf16.gmra.mxu0 %v367
    %v381 = vpop.f32.mrf.mxu0
    %v382 = vadd.f32 %v339, %v381
    %v383 = vpop.f32.mrf.mxu0
    %v384 = vadd.f32 %v344, %v383
    %385 = vmatmul.bf16.gmra.mxu0 %v370
    %v386 = vpop.f32.mrf.mxu0
    %v387 = vadd.f32 %v349, %v386
    %v388 = vpop.f32.mrf.mxu0
    %v389 = vadd.f32 %v354, %v388
    %390 = vdwg.mxu0
    %v391 = vxor.u32 %v382, 2147483648
    %v392 = vxor.u32 %v384, 2147483648
    %v393 = vxor.u32 %v387, 2147483648
    %v394 = vxor.u32 %v389, 2147483648
    %v395 = vmul.f32 %v391, 1.442695
    %v396 = vpow.pop %v395
    %v397 = vmul.f32 %v392, 1.442695
    %v398 = vpow.pop %v397
    %v399 = vmul.f32 %v393, 1.442695
    %v400 = vpow.pop %v399
    %v401 = vmul.f32 %v394, 1.442695
    %v402 = vpow.pop %v401
    %v403 = vadd.f32 %v396, 1.0
    %v404 = vadd.f32 %v398, 1.0
    %v405 = vadd.f32 %v400, 1.0
    %v406 = vadd.f32 %v402, 1.0
    %v407 = vrcp.pop %v403
    %v408 = vmul.f32 %v403, %v407
    %v409 = vsub.f32 1.0, %v408
    %v410 = vmul.f32 %v407, %v409
    %v411 = vadd.f32 %v407, %v410
    %vm412 = vweird.f32 %v403
    %vm413 = vweird.f32 %v407
    %vm414 = vmor %vm412, %vm413
    %v415 = vsel %vm414, %v407, %v411
    %v416 = vand.u32 2147483647, %v403
    %vm417 = vcmp.eq.f32.partialorder %v416, 8.507059e+37
    %v418 = vand.u32 %v403, 2147483648
    %v419 = vor.u32 1.1754944e-38, %v418
    %v420 = vsel %vm417, %v419, %v415
    %v421 = vmul.f32 1.0, %v420
    %v422 = vrcp.pop %v404
    %v423 = vmul.f32 %v404, %v422
    %v424 = vsub.f32 1.0, %v423
    %v425 = vmul.f32 %v422, %v424
    %v426 = vadd.f32 %v422, %v425
    %vm427 = vweird.f32 %v404
    %vm428 = vweird.f32 %v422
    %vm429 = vmor %vm427, %vm428
    %v430 = vsel %vm429, %v422, %v426
    %v431 = vand.u32 2147483647, %v404
    %vm432 = vcmp.eq.f32.partialorder %v431, 8.507059e+37
    %v433 = vand.u32 %v404, 2147483648
    %v434 = vor.u32 1.1754944e-38, %v433
    %v435 = vsel %vm432, %v434, %v430
    %v436 = vmul.f32 1.0, %v435
    %v437 = vrcp.pop %v405
    %v438 = vmul.f32 %v405, %v437
    %v439 = vsub.f32 1.0, %v438
    %v440 = vmul.f32 %v437, %v439
    %v441 = vadd.f32 %v437, %v440
    %vm442 = vweird.f32 %v405
    %vm443 = vweird.f32 %v437
    %vm444 = vmor %vm442, %vm443
    %v445 = vsel %vm444, %v437, %v441
    %v446 = vand.u32 2147483647, %v405
    %vm447 = vcmp.eq.f32.partialorder %v446, 8.507059e+37
    %v448 = vand.u32 %v405, 2147483648
    %v449 = vor.u32 1.1754944e-38, %v448
    %v450 = vsel %vm447, %v449, %v445
    %v451 = vmul.f32 1.0, %v450
    %v452 = vrcp.pop %v406
    %v453 = vmul.f32 %v406, %v452
    %v454 = vsub.f32 1.0, %v453
    %v455 = vmul.f32 %v452, %v454
    %v456 = vadd.f32 %v452, %v455
    %vm457 = vweird.f32 %v406
    %vm458 = vweird.f32 %v452
    %vm459 = vmor %vm457, %vm458
    %v460 = vsel %vm459, %v452, %v456
    %v461 = vand.u32 2147483647, %v406
    %vm462 = vcmp.eq.f32.partialorder %v461, 8.507059e+37
    %v463 = vand.u32 %v406, 2147483648
    %v464 = vor.u32 1.1754944e-38, %v463
    %v465 = vsel %vm462, %v464, %v460
    %v466 = vmul.f32 1.0, %v465
    %468 = vset.pattern.permute.xlu0 0
    %469 = vperm.xlu0 %468, %v63
    %v470 = vpop.permute.xlu0 %469
    %473 = vset.pattern.permute.xlu0 0
    %474 = vperm.xlu0 %473, %v64
    %v475 = vpop.permute.xlu0 %474
    %478 = vset.pattern.permute.xlu0 0
    %479 = vperm.xlu0 %478, %v65
    %v480 = vpop.permute.xlu0 %479
    %483 = vset.pattern.permute.xlu0 0
    %484 = vperm.xlu0 %483, %v66
    %v485 = vpop.permute.xlu0 %484
    %v487 = vmul.f32 %v421, %v470
    %v488 = vmul.f32 %v436, %v475
    %v489 = vmul.f32 %v451, %v480
    %v490 = vmul.f32 %v466, %v485
    %vm491 = vcmask 64512
    %v492 = vsel %vm491, %v487, 0.0
    %v493 = vsel %vm491, %v488, 0.0
    %v494 = vadd.f32 %v492, %v493
    %v495 = vsel %vm491, %v489, 0.0
    %v496 = vadd.f32 %v494, %v495
    %v497 = vsel %vm491, %v490, 0.0
    %v498 = vadd.f32 %v496, %v497
    %v499 = vrot.slane %v498, 4
    %v500 = vadd.f32 %v498, %v499
    %v501 = vrot.slane %v500, 2
    %v502 = vadd.f32 %v500, %v501
    %v503 = vrot.slane %v502, 1
    %v504 = vadd.f32 %v502, %v503
    %506 = vset.pattern.permute.xlu0 0
    %507 = vperm.xlu0 %506, %v67
    %v508 = vpop.permute.xlu0 %507
    %v510 = vperm.slane %v508, 0
    %v511 = vadd.f32 %v504, %v510
    %v512 = vxor.u32 %v511, 2147483648
    %v513 = vmul.f32 %v512, 1.442695
    %v514 = vpow.pop %v513
    %v515 = vadd.f32 %v514, 1.0
    %v516 = vrcp.pop %v515
    %v517 = vmul.f32 %v515, %v516
    %v518 = vsub.f32 1.0, %v517
    %v519 = vmul.f32 %v516, %v518
    %v520 = vadd.f32 %v516, %v519
    %vm521 = vweird.f32 %v515
    %vm522 = vweird.f32 %v516
    %vm523 = vmor %vm521, %vm522
    %v524 = vsel %vm523, %v516, %v520
    %v525 = vand.u32 2147483647, %v515
    %vm526 = vcmp.eq.f32.partialorder %v525, 8.507059e+37
    %v527 = vand.u32 %v515, 2147483648
    %v528 = vor.u32 1.1754944e-38, %v527
    %v529 = vsel %vm526, %v528, %v524
    %v530 = vmul.f32 1.0, %v529
    %vm531 = vcmask 57344
    %532 = vst.msk [vmem:[#allocation3] sm:$0x1] %vm531, %v530
    // Predicated region
    $region38: #{tpu_custom_call.1} parent=1 // pred_check
      _
    $region39: #{tpu_custom_call.1} parent=1 // pred_check_branch
      %534 = sbr.rel (0) target = $region41
    $region40: #{tpu_custom_call.1} parent=1 // pred_region
      %536 = vsyncadd [#allocation4], 0
      %s538 = sshll.u32 [#allocation3], 4
      %s539 = int_to_ptr.vmem [resolvable:$true] %s538
      %s540 = sshll.u32 %s9, 4
      %s541 = int_to_ptr.hbm [resolvable:$true] %s540
      %543 = dma.vmem_to_hbm [thread:$0]  %s539, 16, %s541, [#allocation4]
    $region41: #{tpu_custom_call.1} parent=1 // pred_fallthru
      _
    // Predicated region
    $region42: #{tpu_custom_call.1} parent=1 // pred_check
      _
    $region43: #{tpu_custom_call.1} parent=1 // pred_check_branch
      %545 = sbr.rel (0) target = $region45
    $region44: #{tpu_custom_call.1} parent=1 // pred_region
      %547 = dma.done [#allocation4], 16
    $region45: #{tpu_custom_call.1} parent=1 // pred_fallthru
      _
    %548 = vsyncpa [#allocation4], 1

</llo_original>
